<compile_context>
chip_gen: v7x
topology: tpu7x:2x2x1
jax: 0.10.0
libtpu: 0.0.40
codegen_flags: <defaults>
</compile_context>

<pallas_src>
import functools
import math

import numpy as np

import jax
import jax.numpy as jnp
from jax.experimental import pallas as pl
from jax.experimental.pallas import tpu as pltpu


def _round_up(x: int, m: int) -> int:
    return ((x + m - 1) // m) * m


def _cdiv(a: int, b: int) -> int:
    return -(-a // b)


def _vmem_capacity_bytes() -> int:
    """Best-effort query of per-core VMEM capacity; conservative fallback."""
    try:
        info = pltpu.get_tpu_info()
        for attr in ("vmem_capacity_bytes", "vmem_size_bytes", "vmem_bytes"):
            v = getattr(info, attr, None)
            if v:
                return int(v)
    except Exception:
        pass
    return 64 * 1024 * 1024  # v7x per-TC size: safe lower bound everywhere


def _pe_kernel(t_ref, ss_ref, o_ref):
    # t_ref : (TM, K)  K = groups + 1; last column is all-ones (phase carrier)
    # ss_ref: (K, W)   row g < groups holds scales_full in lanes
    #                  [g*num_dim, (g+1)*num_dim); last row is the tiled phase
    # o_ref : (TM, W)  sin(t*scales_full + phase); W is a multiple of 128 on
    #                  the lane-dense path (unmasked full-width stores)
    z = jnp.dot(
        t_ref[...],
        ss_ref[...],
        preferred_element_type=jnp.float32,
        precision=jax.lax.Precision.HIGHEST,  # keep z within f32 tolerance
    )
    o_ref[...] = jnp.sin(z).astype(o_ref.dtype)


@functools.partial(
    jax.jit,
    static_argnames=("n", "rows", "groups", "num_dim", "tm", "out_dtype", "vmem_limit"),
)
def _pe_encode(t_flat, sel_aug, *, n, rows, groups, num_dim, tm, out_dtype, vmem_limit):
    """Jitted pad -> augment -> pallas_call -> reshape -> slice pipeline."""
    odt = np.dtype(out_dtype)
    k, w = sel_aug.shape

    pad = rows * groups - n
    if pad:
        t_flat = jnp.pad(t_flat, (0, pad))
    t2 = t_flat.reshape(rows, groups)
    # ones column carries the phase row of sel_aug through the same matmul
    t_aug = jnp.concatenate([t2, jnp.ones((rows, 1), t2.dtype)], axis=1)  # (rows, K)

    grid = (pl.cdiv(rows, tm),)
    out = pl.pallas_call(
        _pe_kernel,
        out_shape=jax.ShapeDtypeStruct((rows, w), odt),
        grid_spec=pltpu.PrefetchScalarGridSpec(
            num_scalar_prefetch=0,
            grid=grid,
            in_specs=[
                pl.BlockSpec((tm, k), lambda i: (i, 0)),
                pl.BlockSpec((k, w), lambda i: (0, 0)),   # constant block, DMA'd once
            ],
            out_specs=pl.BlockSpec((tm, w), lambda i: (i, 0)),
        ),
        compiler_params=pltpu.CompilerParams(
            dimension_semantics=("parallel",),
            vmem_limit_bytes=vmem_limit,
        ),
        cost_estimate=pl.CostEstimate(
            flops=2 * rows * w * k,
            transcendentals=rows * w,
            bytes_accessed=rows * w * odt.itemsize + rows * k * 4 + k * w * 4,
        ),
    )(t_aug, sel_aug)

    # (rows, G*num_dim) -> (rows*G, num_dim) is a free row-major reshape.
    out = out.reshape(rows * groups, num_dim)
    if pad:
        out = out[:n]
    return out


class PositionalEncodingPallas:
    """JAX/Pallas port of tsdm PositionalEncoding (forward / encode / decode)."""

    def __init__(self, *, num_dim: int, scale: float, out_dtype=jnp.float32,
                 min_pallas_elements: int = 1 << 16):
        assert num_dim % 2 == 0, "num_dim must be even"
        assert num_dim > 2, "num_dim must be > 2 (scale formula divides by num_dim - 2)"
        self.num_dim = int(num_dim)
        self.scale = float(scale)
        self.out_dtype = np.dtype(out_dtype)
        # Below this many output elements, fall back to plain jnp (pallas_call
        # fixed overhead dominates tiny inputs).
        self.min_pallas_elements = int(min_pallas_elements)

        half = num_dim // 2
        exponents = -2.0 * np.arange(half, dtype=np.float64) / (num_dim - 2)
        scales = (self.scale ** exponents).astype(np.float32)          # (half,)
        assert float(scales[0]) == 1.0, "Something went wrong."
        self.scales = jnp.asarray(scales)                              # buffer

        scales_full = np.concatenate([scales, scales])                 # (num_dim,)
        phase_full = np.concatenate(
            [np.zeros(half, np.float32), np.full(half, np.pi / 2, np.float32)])

        # ---- lane-dense group packing -------------------------------------
        # Base width: smallest multiple of num_dim that is also a multiple of
        # 128 (lcm). Falls back to W=num_dim (masked stores) only when the lcm
        # would be unreasonably large (rare num_dim).
        if num_dim % 128 == 0:
            w_base = num_dim
        else:
            w_lcm = num_dim * 128 // math.gcd(num_dim, 128)
            w_base = w_lcm if w_lcm <= 2048 else num_dim
        g_base = w_base // num_dim

        # Widen toward ~512 lanes: deeper MXU K per push, fewer per-row
        # constants; cap total width / K so the constant matrix stays small.
        target_w = 512
        mult = max(1, target_w // w_base)
        while mult > 1 and (w_base * mult > 2048 or g_base * mult + 1 > 256):
            mult -= 1
        g = g_base * mult
        w = w_base * mult

        k = g + 1                                  # +1 row for the phase
        sel = np.zeros((k, w), np.float32)
        for gi in range(g):
            sel[gi, gi * num_dim:(gi + 1) * num_dim] = scales_full
        sel[g, :] = np.tile(phase_full, g)

        self.groups = g
        self.width = w
        self.sel_aug = jnp.asarray(sel)            # (K, W)

        # Row granularity = native sublane tile for the output dtype.
        itemsize = self.out_dtype.itemsize
        self._row_gran = {4: 8, 2: 16, 1: 32}.get(itemsize, 8)

    # ------------------------------------------------------------------ tiles
    def _choose_tile(self, rows: int) -> tuple[int, int]:
        gran = self._row_gran
        row_bytes = self.width * self.out_dtype.itemsize
        vmem_cap = _vmem_capacity_bytes()
        if vmem_cap >= 100 * 1024 * 1024:          # v5e / v6e: 128 MiB VMEM
            block_target = 8 << 20
            vmem_limit = 64 << 20
        else:                                       # v7x: 64 MiB per TensorCore
            block_target = 4 << 20
            vmem_limit = 48 << 20
        tm = max(gran, (block_target // row_bytes) // gran * gran)
        # target >= 4 grid steps so both v7x TCs get >=2 pipelined blocks each
        tm = min(tm, max(gran, _round_up(_cdiv(rows, 4), gran)))
        tm = min(tm, rows)
        return tm, vmem_limit

    # ----------------------------------------------------------------- encode
    def __call__(self, t: jax.Array) -> jax.Array:
        return self.encode(t)

    def encode(self, t: jax.Array) -> jax.Array:
        """Signature: ``... -> (..., num_dim)``."""
        orig_shape = tuple(t.shape)
        t_flat = jnp.asarray(t, jnp.float32).reshape(-1)
        n = int(t_flat.shape[0])
        if n == 0:
            return jnp.zeros((*orig_shape, self.num_dim), dtype=self.out_dtype)

        if n * self.num_dim < self.min_pallas_elements:
            # tiny-input fallback: plain XLA
            z = t_flat[:, None] * self.scales[None, :]
            out = jnp.concatenate([jnp.sin(z), jnp.cos(z)], axis=-1)
            return out.astype(self.out_dtype).reshape(*orig_shape, self.num_dim)

        g = self.groups
        rows = _round_up(_cdiv(n, g), self._row_gran)   # minimal row padding
        tm, vmem_limit = self._choose_tile(rows)

        out = _pe_encode(
            t_flat, self.sel_aug,
            n=n, rows=rows, groups=g, num_dim=self.num_dim,
            tm=tm, out_dtype=self.out_dtype.name, vmem_limit=vmem_limit)
        return out.reshape(*orig_shape, self.num_dim)

    forward = encode

    # ----------------------------------------------------------------- decode
    def decode(self, z: jax.Array) -> jax.Array:
        """Signature: ``(..., num_dim) -> ...`` (principal arcsin branch, as in torch)."""
        return jnp.arcsin(z[..., 0].astype(jnp.float32))

    inverse = decode


if __name__ == "__main__":
    key = jax.random.PRNGKey(0)

    def reference(enc, t):
        z = jnp.asarray(t, jnp.float32)[..., None] * enc.scales      # (..., half)
        return jnp.concatenate([jnp.sin(z), jnp.cos(z)], axis=-1)

    cases = [
        # (t_shape, num_dim, scale, out_dtype, tol)
        ((2, 8), 32, 10.0, jnp.float32, 2e-5),    # 128 % num_dim == 0, widened to W=512
        ((3, 7), 8, 100.0, jnp.float32, 2e-5),    # deep group packing (G=64)
        ((5,), 256, 10.0, jnp.float32, 2e-5),     # num_dim multiple of 128
        ((4, 37), 48, 10.0, jnp.float32, 2e-5),   # lcm lane packing (W=384), group+row padding
        ((5, 64), 48, 10.0, jnp.float32, 2e-5),   # multi-step grid with partial last block
        ((2, 25), 16, 10.0, jnp.bfloat16, 1e-2),  # bf16 output, (16,128) row granularity
    ]
    for shape, num_dim, scale, odt, tol in cases:
        key, sub = jax.random.split(key)
        t = jax.random.uniform(sub, shape, dtype=jnp.float32) * 10.0
        enc = PositionalEncodingPallas(num_dim=num_dim, scale=scale,
                                       out_dtype=odt, min_pallas_elements=0)
        out = jax.block_until_ready(enc(t))
        ref = reference(enc, t).astype(odt)
        assert out.shape == (*shape, num_dim), (out.shape, shape, num_dim)
        assert out.dtype == np.dtype(odt), (out.dtype, odt)
        assert jnp.allclose(out.astype(jnp.float32), ref.astype(jnp.float32),
                            atol=tol, rtol=tol), (
            f"mismatch vs reference for shape={shape}, num_dim={num_dim}, dtype={odt}")
        _ = jax.block_until_ready(enc.decode(out))   # smoke-test decode path

    print("KERNEL_OK")
</pallas_src>

<mosaic_0001>
module attributes {stable_mosaic.version = 11 : i64} {
  func.func @_pe_kernel(%arg0: i32, %arg1: memref<8x17xf32, #tpu.memory_space<vmem>>, %arg2: memref<17x512xf32, #tpu.memory_space<vmem>>, %arg3: memref<8x512xf32, #tpu.memory_space<vmem>>) attributes {dimension_semantics = [#tpu.dimension_semantics<parallel>], iteration_bounds = array<i64: 1>, scalar_prefetch = 0 : i64, scratch_operands = 0 : i64, tpu.core_type = #tpu.core_type<tc>, window_params = [{transform_indices = @transform_0, window_bounds = array<i64: 8, 17>}, {pipeline_mode = #tpu.pipeline_mode<synchronous>, transform_indices = @transform_1, window_bounds = array<i64: 17, 512>}, {transform_indices = @transform_2, window_bounds = array<i64: 8, 512>}]} {
    %c0 = arith.constant 0 : index
    %c0_0 = arith.constant 0 : index
    %0 = vector.load %arg1[%c0, %c0_0] : memref<8x17xf32, #tpu.memory_space<vmem>>, vector<8x17xf32>
    %c0_1 = arith.constant 0 : index
    %c0_2 = arith.constant 0 : index
    %1 = vector.load %arg2[%c0_1, %c0_2] : memref<17x512xf32, #tpu.memory_space<vmem>>, vector<17x512xf32>
    %cst = arith.constant dense<0.000000e+00> : vector<8x512xf32>
    %2 = tpu.matmul %0, %1, %cst {dimension_numbers = #tpu.dot_dimension_numbers<[1], [0], [0], [1], [0, 0, 1, 1], [], []>, precision = #tpu.contract_precision<fp32>} : vector<8x17xf32>, vector<17x512xf32>, vector<8x512xf32> -> vector<8x512xf32>
    %3 = math.sin %2 : vector<8x512xf32>
    %c0_3 = arith.constant 0 : index
    %c0_4 = arith.constant 0 : index
    %4 = vector.load %arg3[%c0_3, %c0_4] : memref<8x512xf32, #tpu.memory_space<vmem>>, vector<8x512xf32>
    tpu.vector_store %arg3[%c0_3, %c0_4], %3 {strides = array<i32>} : memref<8x512xf32, #tpu.memory_space<vmem>>, vector<8x512xf32>,
    return
  }
  func.func @transform_0(%arg0: i32) -> (i32, i32) {
    %c0_i32 = arith.constant 0 : i32
    %c0_i32_0 = arith.constant 0 : i32
    return %arg0, %c0_i32 : i32, i32
  }
  func.func @transform_1(%arg0: i32) -> (i32, i32) {
    %c0_i32 = arith.constant 0 : i32
    %c0_i32_0 = arith.constant 0 : i32
    %c0_i32_1 = arith.constant 0 : i32
    return %c0_i32, %c0_i32_0 : i32, i32
  }
  func.func @transform_2(%arg0: i32) -> (i32, i32) {
    %c0_i32 = arith.constant 0 : i32
    %c0_i32_0 = arith.constant 0 : i32
    return %arg0, %c0_i32 : i32, i32
  }
}

</mosaic_0001>

<llo_original>
// kernel: _pe_encode.1
$region0: #{_pe_encode.1}
  #allocation0 [shape = 'u32[]', space=smem, size = 0x4, offset = 0x4, fixed_abs, tag = 'smem constant byte address 0x4 - core index']
  #allocation1 [shape = 'u32[144,128]{1,0:T(1,128)}', space=vmem, size = 0x12000, scoped, tag = 'internal scratch']
  %s0 = inlined_call_operand.vmem [shape: f32[8,17], index: 0, kind: input, shape index: {}]
  %s1 = inlined_call_operand.hbm [shape: f32[17,512], index: 1, kind: input, shape index: {}]
  %s2 = inlined_call_operand.vmem [shape: f32[8,512], index: 2, kind: output, shape index: {}]
  %s3 = sld [smem:[#allocation0]]
  $region22: #{_pe_encode.1} parent=0
    _
  %s5 = ssub.s32 1, %s3
  %s6 = scalar_select 0, %s5, %s3
  $region1: #{_pe_encode.1} parent=0
    #allocation2 [shape = 'u8[49152]{0}', space=vmem, size = 0xc000, scoped, tag = 'input window, operand 1, single buffered']
    #allocation3 [shape = 's32[1]{0}', space=sflag, size = 0x4, scoped, tag = 'scoped memory for _pe_encode.1']
    %7 = vsyncpa [#allocation3], 0
    // Predicated region
    $region2: #{_pe_encode.1} parent=1 // pred_check
      _
    $region3: #{_pe_encode.1} parent=1 // pred_check_branch
      %9 = sbr.rel (0) target = $region5
    $region4: #{_pe_encode.1} parent=1 // pred_region
      _
    $region5: #{_pe_encode.1} parent=1 // pred_fallthru
      _
    // Predicated region
    $region6: #{_pe_encode.1} parent=1 // pred_check
      _
    $region7: #{_pe_encode.1} parent=1 // pred_check_branch
      %11 = sbr.rel (0) target = $region9
    $region8: #{_pe_encode.1} parent=1 // pred_region
      %s13 = ssub.s32 1536, 1536
      %14 = vsyncadd [#allocation3], %s13
      %s15 = sshll.u32 [#allocation2], 4
      %s16 = int_to_ptr.vmem [resolvable:$true] %s15
      %21 = dma.hbm_to_vmem [thread:$0]  %s1, 1536, %s16, [#allocation3], 512, 512, 32
    $region9: #{_pe_encode.1} parent=1 // pred_fallthru
      _
    // Predicated region
    $region10: #{_pe_encode.1} parent=1 // pred_check
      _
    $region11: #{_pe_encode.1} parent=1 // pred_check_branch
      %23 = sbr.rel (0) target = $region13
    $region12: #{_pe_encode.1} parent=1 // pred_region
      %24 = dma.done [#allocation3], 1536
    $region13: #{_pe_encode.1} parent=1 // pred_fallthru
      _
    %v25 = vld [vmem:[%s0] sm:$0xff]
    %v26 = vld [vmem:[#allocation2] sm:$0xff]
    %v27 = vld [vmem:[#allocation2 + $0x8] sm:$0xff]
    %v28 = vld [vmem:[#allocation2 + $0x10] sm:$0xff]
    %v29 = vld [vmem:[#allocation2 + $0x18] sm:$0xff]
    %v30 = vld [vmem:[#allocation2 + $0x20] sm:$0xff]
    %v31 = vld [vmem:[#allocation2 + $0x28] sm:$0xff]
    %v32 = vld [vmem:[#allocation2 + $0x30] sm:$0xff]
    %v33 = vld [vmem:[#allocation2 + $0x38] sm:$0xff]
    %v34 = vld [vmem:[#allocation2 + $0x40] sm:$0x1]
    %v35 = vld [vmem:[#allocation2 + $0x48] sm:$0x1]
    %v36 = vld [vmem:[#allocation2 + $0x50] sm:$0x1]
    %v37 = vld [vmem:[#allocation2 + $0x58] sm:$0x1]
    %vm38 = vcmask 138240
    %v40 = vsel %vm38, %v25, 0
    %vm42 = vcmask 1040384
    %v44 = vsel %vm42, %v34, 0
    %v47 = vsel %vm42, %v35, 0
    %v50 = vsel %vm42, %v36, 0
    %v53 = vsel %vm42, %v37, 0
    %v55 = vand.u32 %v27, 4294901760
    %56 = vmatprep.subr.mxu0 %v55
    %v57 = vand.u32 %v26, 4294901760
    %58 = vmatpush1.msra.mxu0 %v57
    %v59 = vand.u32 %v31, 4294901760
    %60 = vmatprep.subr.mxu0 %v59
    %v61 = vand.u32 %v30, 4294901760
    %62 = vmatpush1.msra.mxu0 %v61
    %v63 = vand.u32 %v47, 4294901760
    %64 = vmatprep.subr.mxu0 %v63
    %v65 = vand.u32 %v44, 4294901760
    %66 = vmatpush1.msra.mxu0 %v65
    %67 = vmatprep.subr.mxu0 0.0
    %68 = vmatpush1.msra.mxu0 0.0
    %69 = vmatprep.subr.mxu0 0.0
    %70 = vmatpush1.msra.mxu0 0.0
    %71 = vmatprep.subr.mxu0 0.0
    %72 = vmatpush1.msra.mxu0 0.0
    %73 = vmatprep.subr.mxu0 0.0
    %74 = vmatpush1.msra.mxu0 0.0
    %75 = vmatprep.subr.mxu0 0.0
    %76 = vmatpush1.msra.mxu0 0.0
    %77 = vmatprep.subr.mxu0 0.0
    %78 = vmatpush1.msra.mxu0 0.0
    %79 = vmatprep.subr.mxu0 0.0
    %80 = vmatpush1.msra.mxu0 0.0
    %81 = vmatprep.subr.mxu0 0.0
    %82 = vmatpush1.msra.mxu0 0.0
    %83 = vmatprep.subr.mxu0 0.0
    %84 = vmatpush1.msra.mxu0 0.0
    %85 = vmatprep.subr.mxu0 0.0
    %86 = vmatpush1.msra.mxu0 0.0
    %87 = vmatprep.subr.mxu0 0.0
    %88 = vmatpush1.msra.mxu0 0.0
    %89 = vmatprep.subr.mxu0 0.0
    %90 = vmatpush1.msra.mxu0 0.0
    %91 = vmatprep.subr.mxu0 0.0
    %92 = vmatpush1.msra.mxu0 0.0
    %93 = vmatprep.subr.mxu0 0.0
    %94 = vmatpush1.msra.mxu0 0.0
    %95 = vmatprep.subr.mxu0 0.0
    %96 = vmatpush1.msra.mxu0 0.0
    %97 = vmatprep.subr.mxu0 0.0
    %98 = vmatpush1.msra.mxu0 0.0
    %99 = vmatprep.subr.mxu0 0.0
    %100 = vmatpush1.msra.mxu0 0.0
    %101 = vmatprep.subr.mxu0 0.0
    %102 = vmatpush1.msra.mxu0 0.0
    %103 = vmatprep.subr.mxu0 0.0
    %104 = vmatpush1.msra.mxu0 0.0
    %105 = vmatprep.subr.mxu0 0.0
    %106 = vmatpush1.msra.mxu0 0.0
    %107 = vmatprep.subr.mxu0 0.0
    %108 = vmatpush1.msra.mxu0 0.0
    %109 = vmatprep.subr.mxu0 0.0
    %110 = vmatpush1.msra.mxu0 0.0
    %111 = vmatprep.subr.mxu0 0.0
    %112 = vmatpush1.msra.mxu0 0.0
    %113 = vmatprep.subr.mxu0 0.0
    %114 = vmatpush1.msra.mxu0 0.0
    %115 = vmatprep.subr.mxu0 0.0
    %116 = vmatpush1.msra.mxu0 0.0
    %117 = vmatprep.subr.mxu0 0.0
    %118 = vmatpush1.msra.mxu0 0.0
    %119 = vmatprep.subr.mxu0 0.0
    %120 = vmatpush1.msra.mxu0 0.0
    %121 = vmatprep.subr.mxu0 0.0
    %122 = vmatpush1.msra.mxu0 0.0
    %123 = vmatprep.subr.mxu0 0.0
    %124 = vmatpush1.msra.mxu0 0.0
    %125 = vmatprep.mubr.f32.mxu0 0.0
    %v126 = vand.u32 %v40, 4294901760
    %v127 = vsub.f32 %v40, %v126
    %v128 = vand.u32 %v127, 4294901760
    %v129 = vsub.f32 %v127, %v128
    %v130 = vand.u32 %v129, 4294901760
    %131 = vmatmul.mubr.f32.gmra.mrb[0].mxu0 %v130
    %v132 = vpop.f32.mrb[0].mxu0
    %v133 = vadd.f32 0.0, %v132
    %v134 = vpop.f32.mrb[0].mxu0
    %v135 = vadd.f32 0.0, %v134
    %136 = vdwg.mxu0
    %v137 = vand.u32 %v27, 4294901760
    %v138 = vsub.f32 %v27, %v137
    %v139 = vand.u32 %v138, 4294901760
    %v140 = vsub.f32 %v138, %v139
    %v141 = vand.u32 %v140, 4294901760
    %142 = vmatprep.subr.mxu0 %v141
    %v143 = vand.u32 %v26, 4294901760
    %v144 = vsub.f32 %v26, %v143
    %v145 = vand.u32 %v144, 4294901760
    %v146 = vsub.f32 %v144, %v145
    %v147 = vand.u32 %v146, 4294901760
    %148 = vmatpush1.msra.mxu0 %v147
    %v149 = vand.u32 %v31, 4294901760
    %v150 = vsub.f32 %v31, %v149
    %v151 = vand.u32 %v150, 4294901760
    %v152 = vsub.f32 %v150, %v151
    %v153 = vand.u32 %v152, 4294901760
    %154 = vmatprep.subr.mxu0 %v153
    %v155 = vand.u32 %v30, 4294901760
    %v156 = vsub.f32 %v30, %v155
    %v157 = vand.u32 %v156, 4294901760
    %v158 = vsub.f32 %v156, %v157
    %v159 = vand.u32 %v158, 4294901760
    %160 = vmatpush1.msra.mxu0 %v159
    %v161 = vand.u32 %v47, 4294901760
    %v162 = vsub.f32 %v47, %v161
    %v163 = vand.u32 %v162, 4294901760
    %v164 = vsub.f32 %v162, %v163
    %v165 = vand.u32 %v164, 4294901760
    %166 = vmatprep.subr.mxu0 %v165
    %v167 = vand.u32 %v44, 4294901760
    %v168 = vsub.f32 %v44, %v167
    %v169 = vand.u32 %v168, 4294901760
    %v170 = vsub.f32 %v168, %v169
    %v171 = vand.u32 %v170, 4294901760
    %172 = vmatpush1.msra.mxu0 %v171
    %173 = vmatprep.subr.mxu0 0.0
    %174 = vmatpush1.msra.mxu0 0.0
    %175 = vmatprep.subr.mxu0 0.0
    %176 = vmatpush1.msra.mxu0 0.0
    %177 = vmatprep.subr.mxu0 0.0
    %178 = vmatpush1.msra.mxu0 0.0
    %179 = vmatprep.subr.mxu0 0.0
    %180 = vmatpush1.msra.mxu0 0.0
    %181 = vmatprep.subr.mxu0 0.0
    %182 = vmatpush1.msra.mxu0 0.0
    %183 = vmatprep.subr.mxu0 0.0
    %184 = vmatpush1.msra.mxu0 0.0
    %185 = vmatprep.subr.mxu0 0.0
    %186 = vmatpush1.msra.mxu0 0.0
    %187 = vmatprep.subr.mxu0 0.0
    %188 = vmatpush1.msra.mxu0 0.0
    %189 = vmatprep.subr.mxu0 0.0
    %190 = vmatpush1.msra.mxu0 0.0
    %191 = vmatprep.subr.mxu0 0.0
    %192 = vmatpush1.msra.mxu0 0.0
    %193 = vmatprep.subr.mxu0 0.0
    %194 = vmatpush1.msra.mxu0 0.0
    %195 = vmatprep.subr.mxu0 0.0
    %196 = vmatpush1.msra.mxu0 0.0
    %197 = vmatprep.subr.mxu0 0.0
    %198 = vmatpush1.msra.mxu0 0.0
    %199 = vmatprep.subr.mxu0 0.0
    %200 = vmatpush1.msra.mxu0 0.0
    %201 = vmatprep.subr.mxu0 0.0
    %202 = vmatpush1.msra.mxu0 0.0
    %203 = vmatprep.subr.mxu0 0.0
    %204 = vmatpush1.msra.mxu0 0.0
    %205 = vmatprep.subr.mxu0 0.0
    %206 = vmatpush1.msra.mxu0 0.0
    %207 = vmatprep.subr.mxu0 0.0
    %208 = vmatpush1.msra.mxu0 0.0
    %209 = vmatprep.subr.mxu0 0.0
    %210 = vmatpush1.msra.mxu0 0.0
    %211 = vmatprep.subr.mxu0 0.0
    %212 = vmatpush1.msra.mxu0 0.0
    %213 = vmatprep.subr.mxu0 0.0
    %214 = vmatpush1.msra.mxu0 0.0
    %215 = vmatprep.subr.mxu0 0.0
    %216 = vmatpush1.msra.mxu0 0.0
    %217 = vmatprep.subr.mxu0 0.0
    %218 = vmatpush1.msra.mxu0 0.0
    %219 = vmatprep.subr.mxu0 0.0
    %220 = vmatpush1.msra.mxu0 0.0
    %221 = vmatprep.subr.mxu0 0.0
    %222 = vmatpush1.msra.mxu0 0.0
    %223 = vmatprep.subr.mxu0 0.0
    %224 = vmatpush1.msra.mxu0 0.0
    %225 = vmatprep.subr.mxu0 0.0
    %226 = vmatpush1.msra.mxu0 0.0
    %227 = vmatprep.subr.mxu0 0.0
    %228 = vmatpush1.msra.mxu0 0.0
    %229 = vmatprep.subr.mxu0 0.0
    %230 = vmatpush1.msra.mxu0 0.0
    %231 = vmatprep.mubr.f32.mxu0 0.0
    %v232 = vand.u32 %v40, 4294901760
    %233 = vmatmul.mubr.f32.gmra.mrb[0].mxu0 %v232
    %v234 = vpop.f32.mrb[0].mxu0
    %v235 = vadd.f32 %v133, %v234
    %v236 = vpop.f32.mrb[0].mxu0
    %v237 = vadd.f32 %v135, %v236
    %238 = vdwg.mxu0
    %v239 = vand.u32 %v27, 4294901760
    %v240 = vsub.f32 %v27, %v239
    %241 = vmatprep.subr.mxu0 %v240
    %v242 = vand.u32 %v26, 4294901760
    %v243 = vsub.f32 %v26, %v242
    %244 = vmatpush1.msra.mxu0 %v243
    %v245 = vand.u32 %v31, 4294901760
    %v246 = vsub.f32 %v31, %v245
    %247 = vmatprep.subr.mxu0 %v246
    %v248 = vand.u32 %v30, 4294901760
    %v249 = vsub.f32 %v30, %v248
    %250 = vmatpush1.msra.mxu0 %v249
    %v251 = vand.u32 %v47, 4294901760
    %v252 = vsub.f32 %v47, %v251
    %253 = vmatprep.subr.mxu0 %v252
    %v254 = vand.u32 %v44, 4294901760
    %v255 = vsub.f32 %v44, %v254
    %256 = vmatpush1.msra.mxu0 %v255
    %257 = vmatprep.subr.mxu0 0.0
    %258 = vmatpush1.msra.mxu0 0.0
    %259 = vmatprep.subr.mxu0 0.0
    %260 = vmatpush1.msra.mxu0 0.0
    %261 = vmatprep.subr.mxu0 0.0
    %262 = vmatpush1.msra.mxu0 0.0
    %263 = vmatprep.subr.mxu0 0.0
    %264 = vmatpush1.msra.mxu0 0.0
    %265 = vmatprep.subr.mxu0 0.0
    %266 = vmatpush1.msra.mxu0 0.0
    %267 = vmatprep.subr.mxu0 0.0
    %268 = vmatpush1.msra.mxu0 0.0
    %269 = vmatprep.subr.mxu0 0.0
    %270 = vmatpush1.msra.mxu0 0.0
    %271 = vmatprep.subr.mxu0 0.0
    %272 = vmatpush1.msra.mxu0 0.0
    %273 = vmatprep.subr.mxu0 0.0
    %274 = vmatpush1.msra.mxu0 0.0
    %275 = vmatprep.subr.mxu0 0.0
    %276 = vmatpush1.msra.mxu0 0.0
    %277 = vmatprep.subr.mxu0 0.0
    %278 = vmatpush1.msra.mxu0 0.0
    %279 = vmatprep.subr.mxu0 0.0
    %280 = vmatpush1.msra.mxu0 0.0
    %281 = vmatprep.subr.mxu0 0.0
    %282 = vmatpush1.msra.mxu0 0.0
    %283 = vmatprep.subr.mxu0 0.0
    %284 = vmatpush1.msra.mxu0 0.0
    %285 = vmatprep.subr.mxu0 0.0
    %286 = vmatpush1.msra.mxu0 0.0
    %287 = vmatprep.subr.mxu0 0.0
    %288 = vmatpush1.msra.mxu0 0.0
    %289 = vmatprep.subr.mxu0 0.0
    %290 = vmatpush1.msra.mxu0 0.0
    %291 = vmatprep.subr.mxu0 0.0
    %292 = vmatpush1.msra.mxu0 0.0
    %293 = vmatprep.subr.mxu0 0.0
    %294 = vmatpush1.msra.mxu0 0.0
    %295 = vmatprep.subr.mxu0 0.0
    %296 = vmatpush1.msra.mxu0 0.0
    %297 = vmatprep.subr.mxu0 0.0
    %298 = vmatpush1.msra.mxu0 0.0
    %299 = vmatprep.subr.mxu0 0.0
    %300 = vmatpush1.msra.mxu0 0.0
    %301 = vmatprep.subr.mxu0 0.0
    %302 = vmatpush1.msra.mxu0 0.0
    %303 = vmatprep.subr.mxu0 0.0
    %304 = vmatpush1.msra.mxu0 0.0
    %305 = vmatprep.subr.mxu0 0.0
    %306 = vmatpush1.msra.mxu0 0.0
    %307 = vmatprep.subr.mxu0 0.0
    %308 = vmatpush1.msra.mxu0 0.0
    %309 = vmatprep.subr.mxu0 0.0
    %310 = vmatpush1.msra.mxu0 0.0
    %311 = vmatprep.subr.mxu0 0.0
    %312 = vmatpush1.msra.mxu0 0.0
    %313 = vmatprep.subr.mxu0 0.0
    %314 = vmatpush1.msra.mxu0 0.0
    %315 = vmatprep.mubr.f32.mxu0 0.0
    %v316 = vand.u32 %v40, 4294901760
    %v317 = vsub.f32 %v40, %v316
    %318 = vmatmul.mubr.f32.gmra.mrb[0].mxu0 %v317
    %v319 = vpop.f32.mrb[0].mxu0
    %v320 = vadd.f32 %v235, %v319
    %v321 = vpop.f32.mrb[0].mxu0
    %v322 = vadd.f32 %v237, %v321
    %323 = vdwg.mxu0
    %v324 = vand.u32 %v27, 4294901760
    %325 = vmatprep.subr.mxu0 %v324
    %v326 = vand.u32 %v26, 4294901760
    %327 = vmatpush1.msra.mxu0 %v326
    %v328 = vand.u32 %v31, 4294901760
    %329 = vmatprep.subr.mxu0 %v328
    %v330 = vand.u32 %v30, 4294901760
    %331 = vmatpush1.msra.mxu0 %v330
    %v332 = vand.u32 %v47, 4294901760
    %333 = vmatprep.subr.mxu0 %v332
    %v334 = vand.u32 %v44, 4294901760
    %335 = vmatpush1.msra.mxu0 %v334
    %336 = vmatprep.subr.mxu0 0.0
    %337 = vmatpush1.msra.mxu0 0.0
    %338 = vmatprep.subr.mxu0 0.0
    %339 = vmatpush1.msra.mxu0 0.0
    %340 = vmatprep.subr.mxu0 0.0
    %341 = vmatpush1.msra.mxu0 0.0
    %342 = vmatprep.subr.mxu0 0.0
    %343 = vmatpush1.msra.mxu0 0.0
    %344 = vmatprep.subr.mxu0 0.0
    %345 = vmatpush1.msra.mxu0 0.0
    %346 = vmatprep.subr.mxu0 0.0
    %347 = vmatpush1.msra.mxu0 0.0
    %348 = vmatprep.subr.mxu0 0.0
    %349 = vmatpush1.msra.mxu0 0.0
    %350 = vmatprep.subr.mxu0 0.0
    %351 = vmatpush1.msra.mxu0 0.0
    %352 = vmatprep.subr.mxu0 0.0
    %353 = vmatpush1.msra.mxu0 0.0
    %354 = vmatprep.subr.mxu0 0.0
    %355 = vmatpush1.msra.mxu0 0.0
    %356 = vmatprep.subr.mxu0 0.0
    %357 = vmatpush1.msra.mxu0 0.0
    %358 = vmatprep.subr.mxu0 0.0
    %359 = vmatpush1.msra.mxu0 0.0
    %360 = vmatprep.subr.mxu0 0.0
    %361 = vmatpush1.msra.mxu0 0.0
    %362 = vmatprep.subr.mxu0 0.0
    %363 = vmatpush1.msra.mxu0 0.0
    %364 = vmatprep.subr.mxu0 0.0
    %365 = vmatpush1.msra.mxu0 0.0
    %366 = vmatprep.subr.mxu0 0.0
    %367 = vmatpush1.msra.mxu0 0.0
    %368 = vmatprep.subr.mxu0 0.0
    %369 = vmatpush1.msra.mxu0 0.0
    %370 = vmatprep.subr.mxu0 0.0
    %371 = vmatpush1.msra.mxu0 0.0
    %372 = vmatprep.subr.mxu0 0.0
    %373 = vmatpush1.msra.mxu0 0.0
    %374 = vmatprep.subr.mxu0 0.0
    %375 = vmatpush1.msra.mxu0 0.0
    %376 = vmatprep.subr.mxu0 0.0
    %377 = vmatpush1.msra.mxu0 0.0
    %378 = vmatprep.subr.mxu0 0.0
    %379 = vmatpush1.msra.mxu0 0.0
    %380 = vmatprep.subr.mxu0 0.0
    %381 = vmatpush1.msra.mxu0 0.0
    %382 = vmatprep.subr.mxu0 0.0
    %383 = vmatpush1.msra.mxu0 0.0
    %384 = vmatprep.subr.mxu0 0.0
    %385 = vmatpush1.msra.mxu0 0.0
    %386 = vmatprep.subr.mxu0 0.0
    %387 = vmatpush1.msra.mxu0 0.0
    %388 = vmatprep.subr.mxu0 0.0
    %389 = vmatpush1.msra.mxu0 0.0
    %390 = vmatprep.subr.mxu0 0.0
    %391 = vmatpush1.msra.mxu0 0.0
    %392 = vmatprep.subr.mxu0 0.0
    %393 = vmatpush1.msra.mxu0 0.0
    %394 = vmatprep.mubr.f32.mxu0 0.0
    %v395 = vand.u32 %v40, 4294901760
    %v396 = vsub.f32 %v40, %v395
    %v397 = vand.u32 %v396, 4294901760
    %398 = vmatmul.mubr.f32.gmra.mrb[0].mxu0 %v397
    %v399 = vpop.f32.mrb[0].mxu0
    %v400 = vadd.f32 %v320, %v399
    %v401 = vpop.f32.mrb[0].mxu0
    %v402 = vadd.f32 %v322, %v401
    %403 = vdwg.mxu0
    %v404 = vand.u32 %v27, 4294901760
    %v405 = vsub.f32 %v27, %v404
    %v406 = vand.u32 %v405, 4294901760
    %407 = vmatprep.subr.mxu0 %v406
    %v408 = vand.u32 %v26, 4294901760
    %v409 = vsub.f32 %v26, %v408
    %v410 = vand.u32 %v409, 4294901760
    %411 = vmatpush1.msra.mxu0 %v410
    %v412 = vand.u32 %v31, 4294901760
    %v413 = vsub.f32 %v31, %v412
    %v414 = vand.u32 %v413, 4294901760
    %415 = vmatprep.subr.mxu0 %v414
    %v416 = vand.u32 %v30, 4294901760
    %v417 = vsub.f32 %v30, %v416
    %v418 = vand.u32 %v417, 4294901760
    %419 = vmatpush1.msra.mxu0 %v418
    %v420 = vand.u32 %v47, 4294901760
    %v421 = vsub.f32 %v47, %v420
    %v422 = vand.u32 %v421, 4294901760
    %423 = vmatprep.subr.mxu0 %v422
    %v424 = vand.u32 %v44, 4294901760
    %v425 = vsub.f32 %v44, %v424
    %v426 = vand.u32 %v425, 4294901760
    %427 = vmatpush1.msra.mxu0 %v426
    %428 = vmatprep.subr.mxu0 0.0
    %429 = vmatpush1.msra.mxu0 0.0
    %430 = vmatprep.subr.mxu0 0.0
    %431 = vmatpush1.msra.mxu0 0.0
    %432 = vmatprep.subr.mxu0 0.0
    %433 = vmatpush1.msra.mxu0 0.0
    %434 = vmatprep.subr.mxu0 0.0
    %435 = vmatpush1.msra.mxu0 0.0
    %436 = vmatprep.subr.mxu0 0.0
    %437 = vmatpush1.msra.mxu0 0.0
    %438 = vmatprep.subr.mxu0 0.0
    %439 = vmatpush1.msra.mxu0 0.0
    %440 = vmatprep.subr.mxu0 0.0
    %441 = vmatpush1.msra.mxu0 0.0
    %442 = vmatprep.subr.mxu0 0.0
    %443 = vmatpush1.msra.mxu0 0.0
    %444 = vmatprep.subr.mxu0 0.0
    %445 = vmatpush1.msra.mxu0 0.0
    %446 = vmatprep.subr.mxu0 0.0
    %447 = vmatpush1.msra.mxu0 0.0
    %448 = vmatprep.subr.mxu0 0.0
    %449 = vmatpush1.msra.mxu0 0.0
    %450 = vmatprep.subr.mxu0 0.0
    %451 = vmatpush1.msra.mxu0 0.0
    %452 = vmatprep.subr.mxu0 0.0
    %453 = vmatpush1.msra.mxu0 0.0
    %454 = vmatprep.subr.mxu0 0.0
    %455 = vmatpush1.msra.mxu0 0.0
    %456 = vmatprep.subr.mxu0 0.0
    %457 = vmatpush1.msra.mxu0 0.0
    %458 = vmatprep.subr.mxu0 0.0
    %459 = vmatpush1.msra.mxu0 0.0
    %460 = vmatprep.subr.mxu0 0.0
    %461 = vmatpush1.msra.mxu0 0.0
    %462 = vmatprep.subr.mxu0 0.0
    %463 = vmatpush1.msra.mxu0 0.0
    %464 = vmatprep.subr.mxu0 0.0
    %465 = vmatpush1.msra.mxu0 0.0
    %466 = vmatprep.subr.mxu0 0.0
    %467 = vmatpush1.msra.mxu0 0.0
    %468 = vmatprep.subr.mxu0 0.0
    %469 = vmatpush1.msra.mxu0 0.0
    %470 = vmatprep.subr.mxu0 0.0
    %471 = vmatpush1.msra.mxu0 0.0
    %472 = vmatprep.subr.mxu0 0.0
    %473 = vmatpush1.msra.mxu0 0.0
    %474 = vmatprep.subr.mxu0 0.0
    %475 = vmatpush1.msra.mxu0 0.0
    %476 = vmatprep.subr.mxu0 0.0
    %477 = vmatpush1.msra.mxu0 0.0
    %478 = vmatprep.subr.mxu0 0.0
    %479 = vmatpush1.msra.mxu0 0.0
    %480 = vmatprep.subr.mxu0 0.0
    %481 = vmatpush1.msra.mxu0 0.0
    %482 = vmatprep.subr.mxu0 0.0
    %483 = vmatpush1.msra.mxu0 0.0
    %484 = vmatprep.subr.mxu0 0.0
    %485 = vmatpush1.msra.mxu0 0.0
    %486 = vmatprep.mubr.f32.mxu0 0.0
    %v487 = vand.u32 %v40, 4294901760
    %488 = vmatmul.mubr.f32.gmra.mrb[0].mxu0 %v487
    %v489 = vpop.f32.mrb[0].mxu0
    %v490 = vadd.f32 %v400, %v489
    %v491 = vpop.f32.mrb[0].mxu0
    %v492 = vadd.f32 %v402, %v491
    %493 = vdwg.mxu0
    %v494 = vand.u32 %v27, 4294901760
    %495 = vmatprep.subr.mxu0 %v494
    %v496 = vand.u32 %v26, 4294901760
    %497 = vmatpush1.msra.mxu0 %v496
    %v498 = vand.u32 %v31, 4294901760
    %499 = vmatprep.subr.mxu0 %v498
    %v500 = vand.u32 %v30, 4294901760
    %501 = vmatpush1.msra.mxu0 %v500
    %v502 = vand.u32 %v47, 4294901760
    %503 = vmatprep.subr.mxu0 %v502
    %v504 = vand.u32 %v44, 4294901760
    %505 = vmatpush1.msra.mxu0 %v504
    %506 = vmatprep.subr.mxu0 0.0
    %507 = vmatpush1.msra.mxu0 0.0
    %508 = vmatprep.subr.mxu0 0.0
    %509 = vmatpush1.msra.mxu0 0.0
    %510 = vmatprep.subr.mxu0 0.0
    %511 = vmatpush1.msra.mxu0 0.0
    %512 = vmatprep.subr.mxu0 0.0
    %513 = vmatpush1.msra.mxu0 0.0
    %514 = vmatprep.subr.mxu0 0.0
    %515 = vmatpush1.msra.mxu0 0.0
    %516 = vmatprep.subr.mxu0 0.0
    %517 = vmatpush1.msra.mxu0 0.0
    %518 = vmatprep.subr.mxu0 0.0
    %519 = vmatpush1.msra.mxu0 0.0
    %520 = vmatprep.subr.mxu0 0.0
    %521 = vmatpush1.msra.mxu0 0.0
    %522 = vmatprep.subr.mxu0 0.0
    %523 = vmatpush1.msra.mxu0 0.0
    %524 = vmatprep.subr.mxu0 0.0
    %525 = vmatpush1.msra.mxu0 0.0
    %526 = vmatprep.subr.mxu0 0.0
    %527 = vmatpush1.msra.mxu0 0.0
    %528 = vmatprep.subr.mxu0 0.0
    %529 = vmatpush1.msra.mxu0 0.0
    %530 = vmatprep.subr.mxu0 0.0
    %531 = vmatpush1.msra.mxu0 0.0
    %532 = vmatprep.subr.mxu0 0.0
    %533 = vmatpush1.msra.mxu0 0.0
    %534 = vmatprep.subr.mxu0 0.0
    %535 = vmatpush1.msra.mxu0 0.0
    %536 = vmatprep.subr.mxu0 0.0
    %537 = vmatpush1.msra.mxu0 0.0
    %538 = vmatprep.subr.mxu0 0.0
    %539 = vmatpush1.msra.mxu0 0.0
    %540 = vmatprep.subr.mxu0 0.0
    %541 = vmatpush1.msra.mxu0 0.0
    %542 = vmatprep.subr.mxu0 0.0
    %543 = vmatpush1.msra.mxu0 0.0
    %544 = vmatprep.subr.mxu0 0.0
    %545 = vmatpush1.msra.mxu0 0.0
    %546 = vmatprep.subr.mxu0 0.0
    %547 = vmatpush1.msra.mxu0 0.0
    %548 = vmatprep.subr.mxu0 0.0
    %549 = vmatpush1.msra.mxu0 0.0
    %550 = vmatprep.subr.mxu0 0.0
    %551 = vmatpush1.msra.mxu0 0.0
    %552 = vmatprep.subr.mxu0 0.0
    %553 = vmatpush1.msra.mxu0 0.0
    %554 = vmatprep.subr.mxu0 0.0
    %555 = vmatpush1.msra.mxu0 0.0
    %556 = vmatprep.subr.mxu0 0.0
    %557 = vmatpush1.msra.mxu0 0.0
    %558 = vmatprep.subr.mxu0 0.0
    %559 = vmatpush1.msra.mxu0 0.0
    %560 = vmatprep.subr.mxu0 0.0
    %561 = vmatpush1.msra.mxu0 0.0
    %562 = vmatprep.subr.mxu0 0.0
    %563 = vmatpush1.msra.mxu0 0.0
    %564 = vmatprep.mubr.f32.mxu0 0.0
    %v565 = vand.u32 %v40, 4294901760
    %566 = vmatmul.mubr.f32.gmra.mrb[0].mxu0 %v565
    %v567 = vpop.f32.mrb[0].mxu0
    %v568 = vadd.f32 %v490, %v567
    %v569 = vpop.f32.mrb[0].mxu0
    %v570 = vadd.f32 %v492, %v569
    %571 = vdwg.mxu0
    %v572 = vand.u32 %v29, 4294901760
    %573 = vmatprep.subr.mxu0 %v572
    %v574 = vand.u32 %v28, 4294901760
    %575 = vmatpush1.msra.mxu0 %v574
    %v576 = vand.u32 %v33, 4294901760
    %577 = vmatprep.subr.mxu0 %v576
    %v578 = vand.u32 %v32, 4294901760
    %579 = vmatpush1.msra.mxu0 %v578
    %v580 = vand.u32 %v53, 4294901760
    %581 = vmatprep.subr.mxu0 %v580
    %v582 = vand.u32 %v50, 4294901760
    %583 = vmatpush1.msra.mxu0 %v582
    %584 = vmatprep.subr.mxu0 0.0
    %585 = vmatpush1.msra.mxu0 0.0
    %586 = vmatprep.subr.mxu0 0.0
    %587 = vmatpush1.msra.mxu0 0.0
    %588 = vmatprep.subr.mxu0 0.0
    %589 = vmatpush1.msra.mxu0 0.0
    %590 = vmatprep.subr.mxu0 0.0
    %591 = vmatpush1.msra.mxu0 0.0
    %592 = vmatprep.subr.mxu0 0.0
    %593 = vmatpush1.msra.mxu0 0.0
    %594 = vmatprep.subr.mxu0 0.0
    %595 = vmatpush1.msra.mxu0 0.0
    %596 = vmatprep.subr.mxu0 0.0
    %597 = vmatpush1.msra.mxu0 0.0
    %598 = vmatprep.subr.mxu0 0.0
    %599 = vmatpush1.msra.mxu0 0.0
    %600 = vmatprep.subr.mxu0 0.0
    %601 = vmatpush1.msra.mxu0 0.0
    %602 = vmatprep.subr.mxu0 0.0
    %603 = vmatpush1.msra.mxu0 0.0
    %604 = vmatprep.subr.mxu0 0.0
    %605 = vmatpush1.msra.mxu0 0.0
    %606 = vmatprep.subr.mxu0 0.0
    %607 = vmatpush1.msra.mxu0 0.0
    %608 = vmatprep.subr.mxu0 0.0
    %609 = vmatpush1.msra.mxu0 0.0
    %610 = vmatprep.subr.mxu0 0.0
    %611 = vmatpush1.msra.mxu0 0.0
    %612 = vmatprep.subr.mxu0 0.0
    %613 = vmatpush1.msra.mxu0 0.0
    %614 = vmatprep.subr.mxu0 0.0
    %615 = vmatpush1.msra.mxu0 0.0
    %616 = vmatprep.subr.mxu0 0.0
    %617 = vmatpush1.msra.mxu0 0.0
    %618 = vmatprep.subr.mxu0 0.0
    %619 = vmatpush1.msra.mxu0 0.0
    %620 = vmatprep.subr.mxu0 0.0
    %621 = vmatpush1.msra.mxu0 0.0
    %622 = vmatprep.subr.mxu0 0.0
    %623 = vmatpush1.msra.mxu0 0.0
    %624 = vmatprep.subr.mxu0 0.0
    %625 = vmatpush1.msra.mxu0 0.0
    %626 = vmatprep.subr.mxu0 0.0
    %627 = vmatpush1.msra.mxu0 0.0
    %628 = vmatprep.subr.mxu0 0.0
    %629 = vmatpush1.msra.mxu0 0.0
    %630 = vmatprep.subr.mxu0 0.0
    %631 = vmatpush1.msra.mxu0 0.0
    %632 = vmatprep.subr.mxu0 0.0
    %633 = vmatpush1.msra.mxu0 0.0
    %634 = vmatprep.subr.mxu0 0.0
    %635 = vmatpush1.msra.mxu0 0.0
    %636 = vmatprep.subr.mxu0 0.0
    %637 = vmatpush1.msra.mxu0 0.0
    %638 = vmatprep.subr.mxu0 0.0
    %639 = vmatpush1.msra.mxu0 0.0
    %640 = vmatprep.subr.mxu0 0.0
    %641 = vmatpush1.msra.mxu0 0.0
    %642 = vmatprep.mubr.f32.mxu0 0.0
    %v643 = vand.u32 %v40, 4294901760
    %v644 = vsub.f32 %v40, %v643
    %v645 = vand.u32 %v644, 4294901760
    %v646 = vsub.f32 %v644, %v645
    %v647 = vand.u32 %v646, 4294901760
    %648 = vmatmul.mubr.f32.gmra.mrb[0].mxu0 %v647
    %v649 = vpop.f32.mrb[0].mxu0
    %v650 = vadd.f32 0.0, %v649
    %v651 = vpop.f32.mrb[0].mxu0
    %v652 = vadd.f32 0.0, %v651
    %653 = vdwg.mxu0
    %v654 = vand.u32 %v29, 4294901760
    %v655 = vsub.f32 %v29, %v654
    %v656 = vand.u32 %v655, 4294901760
    %v657 = vsub.f32 %v655, %v656
    %v658 = vand.u32 %v657, 4294901760
    %659 = vmatprep.subr.mxu0 %v658
    %v660 = vand.u32 %v28, 4294901760
    %v661 = vsub.f32 %v28, %v660
    %v662 = vand.u32 %v661, 4294901760
    %v663 = vsub.f32 %v661, %v662
    %v664 = vand.u32 %v663, 4294901760
    %665 = vmatpush1.msra.mxu0 %v664
    %v666 = vand.u32 %v33, 4294901760
    %v667 = vsub.f32 %v33, %v666
    %v668 = vand.u32 %v667, 4294901760
    %v669 = vsub.f32 %v667, %v668
    %v670 = vand.u32 %v669, 4294901760
    %671 = vmatprep.subr.mxu0 %v670
    %v672 = vand.u32 %v32, 4294901760
    %v673 = vsub.f32 %v32, %v672
    %v674 = vand.u32 %v673, 4294901760
    %v675 = vsub.f32 %v673, %v674
    %v676 = vand.u32 %v675, 4294901760
    %677 = vmatpush1.msra.mxu0 %v676
    %v678 = vand.u32 %v53, 4294901760
    %v679 = vsub.f32 %v53, %v678
    %v680 = vand.u32 %v679, 4294901760
    %v681 = vsub.f32 %v679, %v680
    %v682 = vand.u32 %v681, 4294901760
    %683 = vmatprep.subr.mxu0 %v682
    %v684 = vand.u32 %v50, 4294901760
    %v685 = vsub.f32 %v50, %v684
    %v686 = vand.u32 %v685, 4294901760
    %v687 = vsub.f32 %v685, %v686
    %v688 = vand.u32 %v687, 4294901760
    %689 = vmatpush1.msra.mxu0 %v688
    %690 = vmatprep.subr.mxu0 0.0
    %691 = vmatpush1.msra.mxu0 0.0
    %692 = vmatprep.subr.mxu0 0.0
    %693 = vmatpush1.msra.mxu0 0.0
    %694 = vmatprep.subr.mxu0 0.0
    %695 = vmatpush1.msra.mxu0 0.0
    %696 = vmatprep.subr.mxu0 0.0
    %697 = vmatpush1.msra.mxu0 0.0
    %698 = vmatprep.subr.mxu0 0.0
    %699 = vmatpush1.msra.mxu0 0.0
    %700 = vmatprep.subr.mxu0 0.0
    %701 = vmatpush1.msra.mxu0 0.0
    %702 = vmatprep.subr.mxu0 0.0
    %703 = vmatpush1.msra.mxu0 0.0
    %704 = vmatprep.subr.mxu0 0.0
    %705 = vmatpush1.msra.mxu0 0.0
    %706 = vmatprep.subr.mxu0 0.0
    %707 = vmatpush1.msra.mxu0 0.0
    %708 = vmatprep.subr.mxu0 0.0
    %709 = vmatpush1.msra.mxu0 0.0
    %710 = vmatprep.subr.mxu0 0.0
    %711 = vmatpush1.msra.mxu0 0.0
    %712 = vmatprep.subr.mxu0 0.0
    %713 = vmatpush1.msra.mxu0 0.0
    %714 = vmatprep.subr.mxu0 0.0
    %715 = vmatpush1.msra.mxu0 0.0
    %716 = vmatprep.subr.mxu0 0.0
    %717 = vmatpush1.msra.mxu0 0.0
    %718 = vmatprep.subr.mxu0 0.0
    %719 = vmatpush1.msra.mxu0 0.0
    %720 = vmatprep.subr.mxu0 0.0
    %721 = vmatpush1.msra.mxu0 0.0
    %722 = vmatprep.subr.mxu0 0.0
    %723 = vmatpush1.msra.mxu0 0.0
    %724 = vmatprep.subr.mxu0 0.0
    %725 = vmatpush1.msra.mxu0 0.0
    %726 = vmatprep.subr.mxu0 0.0
    %727 = vmatpush1.msra.mxu0 0.0
    %728 = vmatprep.subr.mxu0 0.0
    %729 = vmatpush1.msra.mxu0 0.0
    %730 = vmatprep.subr.mxu0 0.0
    %731 = vmatpush1.msra.mxu0 0.0
    %732 = vmatprep.subr.mxu0 0.0
    %733 = vmatpush1.msra.mxu0 0.0
    %734 = vmatprep.subr.mxu0 0.0
    %735 = vmatpush1.msra.mxu0 0.0
    %736 = vmatprep.subr.mxu0 0.0
    %737 = vmatpush1.msra.mxu0 0.0
    %738 = vmatprep.subr.mxu0 0.0
    %739 = vmatpush1.msra.mxu0 0.0
    %740 = vmatprep.subr.mxu0 0.0
    %741 = vmatpush1.msra.mxu0 0.0
    %742 = vmatprep.subr.mxu0 0.0
    %743 = vmatpush1.msra.mxu0 0.0
    %744 = vmatprep.subr.mxu0 0.0
    %745 = vmatpush1.msra.mxu0 0.0
    %746 = vmatprep.subr.mxu0 0.0
    %747 = vmatpush1.msra.mxu0 0.0
    %748 = vmatprep.mubr.f32.mxu0 0.0
    %v749 = vand.u32 %v40, 4294901760
    %750 = vmatmul.mubr.f32.gmra.mrb[0].mxu0 %v749
    %v751 = vpop.f32.mrb[0].mxu0
    %v752 = vadd.f32 %v650, %v751
    %v753 = vpop.f32.mrb[0].mxu0
    %v754 = vadd.f32 %v652, %v753
    %755 = vdwg.mxu0
    %v756 = vand.u32 %v29, 4294901760
    %v757 = vsub.f32 %v29, %v756
    %758 = vmatprep.subr.mxu0 %v757
    %v759 = vand.u32 %v28, 4294901760
    %v760 = vsub.f32 %v28, %v759
    %761 = vmatpush1.msra.mxu0 %v760
    %v762 = vand.u32 %v33, 4294901760
    %v763 = vsub.f32 %v33, %v762
    %764 = vmatprep.subr.mxu0 %v763
    %v765 = vand.u32 %v32, 4294901760
    %v766 = vsub.f32 %v32, %v765
    %767 = vmatpush1.msra.mxu0 %v766
    %v768 = vand.u32 %v53, 4294901760
    %v769 = vsub.f32 %v53, %v768
    %770 = vmatprep.subr.mxu0 %v769
    %v771 = vand.u32 %v50, 4294901760
    %v772 = vsub.f32 %v50, %v771
    %773 = vmatpush1.msra.mxu0 %v772
    %774 = vmatprep.subr.mxu0 0.0
    %775 = vmatpush1.msra.mxu0 0.0
    %776 = vmatprep.subr.mxu0 0.0
    %777 = vmatpush1.msra.mxu0 0.0
    %778 = vmatprep.subr.mxu0 0.0
    %779 = vmatpush1.msra.mxu0 0.0
    %780 = vmatprep.subr.mxu0 0.0
    %781 = vmatpush1.msra.mxu0 0.0
    %782 = vmatprep.subr.mxu0 0.0
    %783 = vmatpush1.msra.mxu0 0.0
    %784 = vmatprep.subr.mxu0 0.0
    %785 = vmatpush1.msra.mxu0 0.0
    %786 = vmatprep.subr.mxu0 0.0
    %787 = vmatpush1.msra.mxu0 0.0
    %788 = vmatprep.subr.mxu0 0.0
    %789 = vmatpush1.msra.mxu0 0.0
    %790 = vmatprep.subr.mxu0 0.0
    %791 = vmatpush1.msra.mxu0 0.0
    %792 = vmatprep.subr.mxu0 0.0
    %793 = vmatpush1.msra.mxu0 0.0
    %794 = vmatprep.subr.mxu0 0.0
    %795 = vmatpush1.msra.mxu0 0.0
    %796 = vmatprep.subr.mxu0 0.0
    %797 = vmatpush1.msra.mxu0 0.0
    %798 = vmatprep.subr.mxu0 0.0
    %799 = vmatpush1.msra.mxu0 0.0
    %800 = vmatprep.subr.mxu0 0.0
    %801 = vmatpush1.msra.mxu0 0.0
    %802 = vmatprep.subr.mxu0 0.0
    %803 = vmatpush1.msra.mxu0 0.0
    %804 = vmatprep.subr.mxu0 0.0
    %805 = vmatpush1.msra.mxu0 0.0
    %806 = vmatprep.subr.mxu0 0.0
    %807 = vmatpush1.msra.mxu0 0.0
    %808 = vmatprep.subr.mxu0 0.0
    %809 = vmatpush1.msra.mxu0 0.0
    %810 = vmatprep.subr.mxu0 0.0
    %811 = vmatpush1.msra.mxu0 0.0
    %812 = vmatprep.subr.mxu0 0.0
    %813 = vmatpush1.msra.mxu0 0.0
    %814 = vmatprep.subr.mxu0 0.0
    %815 = vmatpush1.msra.mxu0 0.0
    %816 = vmatprep.subr.mxu0 0.0
    %817 = vmatpush1.msra.mxu0 0.0
    %818 = vmatprep.subr.mxu0 0.0
    %819 = vmatpush1.msra.mxu0 0.0
    %820 = vmatprep.subr.mxu0 0.0
    %821 = vmatpush1.msra.mxu0 0.0
    %822 = vmatprep.subr.mxu0 0.0
    %823 = vmatpush1.msra.mxu0 0.0
    %824 = vmatprep.subr.mxu0 0.0
    %825 = vmatpush1.msra.mxu0 0.0
    %826 = vmatprep.subr.mxu0 0.0
    %827 = vmatpush1.msra.mxu0 0.0
    %828 = vmatprep.subr.mxu0 0.0
    %829 = vmatpush1.msra.mxu0 0.0
    %830 = vmatprep.subr.mxu0 0.0
    %831 = vmatpush1.msra.mxu0 0.0
    %832 = vmatprep.mubr.f32.mxu0 0.0
    %v833 = vand.u32 %v40, 4294901760
    %v834 = vsub.f32 %v40, %v833
    %835 = vmatmul.mubr.f32.gmra.mrb[0].mxu0 %v834
    %v836 = vpop.f32.mrb[0].mxu0
    %v837 = vadd.f32 %v752, %v836
    %v838 = vpop.f32.mrb[0].mxu0
    %v839 = vadd.f32 %v754, %v838
    %840 = vdwg.mxu0
    %v841 = vand.u32 %v29, 4294901760
    %842 = vmatprep.subr.mxu0 %v841
    %v843 = vand.u32 %v28, 4294901760
    %844 = vmatpush1.msra.mxu0 %v843
    %v845 = vand.u32 %v33, 4294901760
    %846 = vmatprep.subr.mxu0 %v845
    %v847 = vand.u32 %v32, 4294901760
    %848 = vmatpush1.msra.mxu0 %v847
    %v849 = vand.u32 %v53, 4294901760
    %850 = vmatprep.subr.mxu0 %v849
    %v851 = vand.u32 %v50, 4294901760
    %852 = vmatpush1.msra.mxu0 %v851
    %853 = vmatprep.subr.mxu0 0.0
    %854 = vmatpush1.msra.mxu0 0.0
    %855 = vmatprep.subr.mxu0 0.0
    %856 = vmatpush1.msra.mxu0 0.0
    %857 = vmatprep.subr.mxu0 0.0
    %858 = vmatpush1.msra.mxu0 0.0
    %859 = vmatprep.subr.mxu0 0.0
    %860 = vmatpush1.msra.mxu0 0.0
    %861 = vmatprep.subr.mxu0 0.0
    %862 = vmatpush1.msra.mxu0 0.0
    %863 = vmatprep.subr.mxu0 0.0
    %864 = vmatpush1.msra.mxu0 0.0
    %865 = vmatprep.subr.mxu0 0.0
    %866 = vmatpush1.msra.mxu0 0.0
    %867 = vmatprep.subr.mxu0 0.0
    %868 = vmatpush1.msra.mxu0 0.0
    %869 = vmatprep.subr.mxu0 0.0
    %870 = vmatpush1.msra.mxu0 0.0
    %871 = vmatprep.subr.mxu0 0.0
    %872 = vmatpush1.msra.mxu0 0.0
    %873 = vmatprep.subr.mxu0 0.0
    %874 = vmatpush1.msra.mxu0 0.0
    %875 = vmatprep.subr.mxu0 0.0
    %876 = vmatpush1.msra.mxu0 0.0
    %877 = vmatprep.subr.mxu0 0.0
    %878 = vmatpush1.msra.mxu0 0.0
    %879 = vmatprep.subr.mxu0 0.0
    %880 = vmatpush1.msra.mxu0 0.0
    %881 = vmatprep.subr.mxu0 0.0
    %882 = vmatpush1.msra.mxu0 0.0
    %883 = vmatprep.subr.mxu0 0.0
    %884 = vmatpush1.msra.mxu0 0.0
    %885 = vmatprep.subr.mxu0 0.0
    %886 = vmatpush1.msra.mxu0 0.0
    %887 = vmatprep.subr.mxu0 0.0
    %888 = vmatpush1.msra.mxu0 0.0
    %889 = vmatprep.subr.mxu0 0.0
    %890 = vmatpush1.msra.mxu0 0.0
    %891 = vmatprep.subr.mxu0 0.0
    %892 = vmatpush1.msra.mxu0 0.0
    %893 = vmatprep.subr.mxu0 0.0
    %894 = vmatpush1.msra.mxu0 0.0
    %895 = vmatprep.subr.mxu0 0.0
    %896 = vmatpush1.msra.mxu0 0.0
    %897 = vmatprep.subr.mxu0 0.0
    %898 = vmatpush1.msra.mxu0 0.0
    %899 = vmatprep.subr.mxu0 0.0
    %900 = vmatpush1.msra.mxu0 0.0
    %901 = vmatprep.subr.mxu0 0.0
    %902 = vmatpush1.msra.mxu0 0.0
    %903 = vmatprep.subr.mxu0 0.0
    %904 = vmatpush1.msra.mxu0 0.0
    %905 = vmatprep.subr.mxu0 0.0
    %906 = vmatpush1.msra.mxu0 0.0
    %907 = vmatprep.subr.mxu0 0.0
    %908 = vmatpush1.msra.mxu0 0.0
    %909 = vmatprep.subr.mxu0 0.0
    %910 = vmatpush1.msra.mxu0 0.0
    %911 = vmatprep.mubr.f32.mxu0 0.0
    %v912 = vand.u32 %v40, 4294901760
    %v913 = vsub.f32 %v40, %v912
    %v914 = vand.u32 %v913, 4294901760
    %915 = vmatmul.mubr.f32.gmra.mrb[0].mxu0 %v914
    %v916 = vpop.f32.mrb[0].mxu0
    %v917 = vadd.f32 %v837, %v916
    %v918 = vpop.f32.mrb[0].mxu0
    %v919 = vadd.f32 %v839, %v918
    %920 = vdwg.mxu0
    %v921 = vand.u32 %v29, 4294901760
    %v922 = vsub.f32 %v29, %v921
    %v923 = vand.u32 %v922, 4294901760
    %924 = vmatprep.subr.mxu0 %v923
    %v925 = vand.u32 %v28, 4294901760
    %v926 = vsub.f32 %v28, %v925
    %v927 = vand.u32 %v926, 4294901760
    %928 = vmatpush1.msra.mxu0 %v927
    %v929 = vand.u32 %v33, 4294901760
    %v930 = vsub.f32 %v33, %v929
    %v931 = vand.u32 %v930, 4294901760
    %932 = vmatprep.subr.mxu0 %v931
    %v933 = vand.u32 %v32, 4294901760
    %v934 = vsub.f32 %v32, %v933
    %v935 = vand.u32 %v934, 4294901760
    %936 = vmatpush1.msra.mxu0 %v935
    %v937 = vand.u32 %v53, 4294901760
    %v938 = vsub.f32 %v53, %v937
    %v939 = vand.u32 %v938, 4294901760
    %940 = vmatprep.subr.mxu0 %v939
    %v941 = vand.u32 %v50, 4294901760
    %v942 = vsub.f32 %v50, %v941
    %v943 = vand.u32 %v942, 4294901760
    %944 = vmatpush1.msra.mxu0 %v943
    %945 = vmatprep.subr.mxu0 0.0
    %946 = vmatpush1.msra.mxu0 0.0
    %947 = vmatprep.subr.mxu0 0.0
    %948 = vmatpush1.msra.mxu0 0.0
    %949 = vmatprep.subr.mxu0 0.0
    %950 = vmatpush1.msra.mxu0 0.0
    %951 = vmatprep.subr.mxu0 0.0
    %952 = vmatpush1.msra.mxu0 0.0
    %953 = vmatprep.subr.mxu0 0.0
    %954 = vmatpush1.msra.mxu0 0.0
    %955 = vmatprep.subr.mxu0 0.0
    %956 = vmatpush1.msra.mxu0 0.0
    %957 = vmatprep.subr.mxu0 0.0
    %958 = vmatpush1.msra.mxu0 0.0
    %959 = vmatprep.subr.mxu0 0.0
    %960 = vmatpush1.msra.mxu0 0.0
    %961 = vmatprep.subr.mxu0 0.0
    %962 = vmatpush1.msra.mxu0 0.0
    %963 = vmatprep.subr.mxu0 0.0
    %964 = vmatpush1.msra.mxu0 0.0
    %965 = vmatprep.subr.mxu0 0.0
    %966 = vmatpush1.msra.mxu0 0.0
    %967 = vmatprep.subr.mxu0 0.0
    %968 = vmatpush1.msra.mxu0 0.0
    %969 = vmatprep.subr.mxu0 0.0
    %970 = vmatpush1.msra.mxu0 0.0
    %971 = vmatprep.subr.mxu0 0.0
    %972 = vmatpush1.msra.mxu0 0.0
    %973 = vmatprep.subr.mxu0 0.0
    %974 = vmatpush1.msra.mxu0 0.0
    %975 = vmatprep.subr.mxu0 0.0
    %976 = vmatpush1.msra.mxu0 0.0
    %977 = vmatprep.subr.mxu0 0.0
    %978 = vmatpush1.msra.mxu0 0.0
    %979 = vmatprep.subr.mxu0 0.0
    %980 = vmatpush1.msra.mxu0 0.0
    %981 = vmatprep.subr.mxu0 0.0
    %982 = vmatpush1.msra.mxu0 0.0
    %983 = vmatprep.subr.mxu0 0.0
    %984 = vmatpush1.msra.mxu0 0.0
    %985 = vmatprep.subr.mxu0 0.0
    %986 = vmatpush1.msra.mxu0 0.0
    %987 = vmatprep.subr.mxu0 0.0
    %988 = vmatpush1.msra.mxu0 0.0
    %989 = vmatprep.subr.mxu0 0.0
    %990 = vmatpush1.msra.mxu0 0.0
    %991 = vmatprep.subr.mxu0 0.0
    %992 = vmatpush1.msra.mxu0 0.0
    %993 = vmatprep.subr.mxu0 0.0
    %994 = vmatpush1.msra.mxu0 0.0
    %995 = vmatprep.subr.mxu0 0.0
    %996 = vmatpush1.msra.mxu0 0.0
    %997 = vmatprep.subr.mxu0 0.0
    %998 = vmatpush1.msra.mxu0 0.0
    %999 = vmatprep.subr.mxu0 0.0
    %1000 = vmatpush1.msra.mxu0 0.0
    %1001 = vmatprep.subr.mxu0 0.0
    %1002 = vmatpush1.msra.mxu0 0.0
    %1003 = vmatprep.mubr.f32.mxu0 0.0
    %v1004 = vand.u32 %v40, 4294901760
    %1005 = vmatmul.mubr.f32.gmra.mrb[0].mxu0 %v1004
    %v1006 = vpop.f32.mrb[0].mxu0
    %v1007 = vadd.f32 %v917, %v1006
    %v1008 = vpop.f32.mrb[0].mxu0
    %v1009 = vadd.f32 %v919, %v1008
    %1010 = vdwg.mxu0
    %v1011 = vand.u32 %v29, 4294901760
    %1012 = vmatprep.subr.mxu0 %v1011
    %v1013 = vand.u32 %v28, 4294901760
    %1014 = vmatpush1.msra.mxu0 %v1013
    %v1015 = vand.u32 %v33, 4294901760
    %1016 = vmatprep.subr.mxu0 %v1015
    %v1017 = vand.u32 %v32, 4294901760
    %1018 = vmatpush1.msra.mxu0 %v1017
    %v1019 = vand.u32 %v53, 4294901760
    %1020 = vmatprep.subr.mxu0 %v1019
    %v1021 = vand.u32 %v50, 4294901760
    %1022 = vmatpush1.msra.mxu0 %v1021
    %1023 = vmatprep.subr.mxu0 0.0
    %1024 = vmatpush1.msra.mxu0 0.0
    %1025 = vmatprep.subr.mxu0 0.0
    %1026 = vmatpush1.msra.mxu0 0.0
    %1027 = vmatprep.subr.mxu0 0.0
    %1028 = vmatpush1.msra.mxu0 0.0
    %1029 = vmatprep.subr.mxu0 0.0
    %1030 = vmatpush1.msra.mxu0 0.0
    %1031 = vmatprep.subr.mxu0 0.0
    %1032 = vmatpush1.msra.mxu0 0.0
    %1033 = vmatprep.subr.mxu0 0.0
    %1034 = vmatpush1.msra.mxu0 0.0
    %1035 = vmatprep.subr.mxu0 0.0
    %1036 = vmatpush1.msra.mxu0 0.0
    %1037 = vmatprep.subr.mxu0 0.0
    %1038 = vmatpush1.msra.mxu0 0.0
    %1039 = vmatprep.subr.mxu0 0.0
    %1040 = vmatpush1.msra.mxu0 0.0
    %1041 = vmatprep.subr.mxu0 0.0
    %1042 = vmatpush1.msra.mxu0 0.0
    %1043 = vmatprep.subr.mxu0 0.0
    %1044 = vmatpush1.msra.mxu0 0.0
    %1045 = vmatprep.subr.mxu0 0.0
    %1046 = vmatpush1.msra.mxu0 0.0
    %1047 = vmatprep.subr.mxu0 0.0
    %1048 = vmatpush1.msra.mxu0 0.0
    %1049 = vmatprep.subr.mxu0 0.0
    %1050 = vmatpush1.msra.mxu0 0.0
    %1051 = vmatprep.subr.mxu0 0.0
    %1052 = vmatpush1.msra.mxu0 0.0
    %1053 = vmatprep.subr.mxu0 0.0
    %1054 = vmatpush1.msra.mxu0 0.0
    %1055 = vmatprep.subr.mxu0 0.0
    %1056 = vmatpush1.msra.mxu0 0.0
    %1057 = vmatprep.subr.mxu0 0.0
    %1058 = vmatpush1.msra.mxu0 0.0
    %1059 = vmatprep.subr.mxu0 0.0
    %1060 = vmatpush1.msra.mxu0 0.0
    %1061 = vmatprep.subr.mxu0 0.0
    %1062 = vmatpush1.msra.mxu0 0.0
    %1063 = vmatprep.subr.mxu0 0.0
    %1064 = vmatpush1.msra.mxu0 0.0
    %1065 = vmatprep.subr.mxu0 0.0
    %1066 = vmatpush1.msra.mxu0 0.0
    %1067 = vmatprep.subr.mxu0 0.0
    %1068 = vmatpush1.msra.mxu0 0.0
    %1069 = vmatprep.subr.mxu0 0.0
    %1070 = vmatpush1.msra.mxu0 0.0
    %1071 = vmatprep.subr.mxu0 0.0
    %1072 = vmatpush1.msra.mxu0 0.0
    %1073 = vmatprep.subr.mxu0 0.0
    %1074 = vmatpush1.msra.mxu0 0.0
    %1075 = vmatprep.subr.mxu0 0.0
    %1076 = vmatpush1.msra.mxu0 0.0
    %1077 = vmatprep.subr.mxu0 0.0
    %1078 = vmatpush1.msra.mxu0 0.0
    %1079 = vmatprep.subr.mxu0 0.0
    %1080 = vmatpush1.msra.mxu0 0.0
    %1081 = vmatprep.mubr.f32.mxu0 0.0
    %v1082 = vand.u32 %v40, 4294901760
    %1083 = vmatmul.mubr.f32.gmra.mrb[0].mxu0 %v1082
    %v1084 = vpop.f32.mrb[0].mxu0
    %v1085 = vadd.f32 %v1007, %v1084
    %v1086 = vpop.f32.mrb[0].mxu0
    %v1087 = vadd.f32 %v1009, %v1086
    %1088 = vdwg.mxu0
    %v1089 = vand.u32 2147483647, %v568
    %vm1090 = vcmp.le.f32.partialorder %v1089, 0.7853982
    %vm1091 = vcmp.lt.s32.totalorder %v568, 0
    %v1092 = vand.u32 %v568, 2139095040
    %v1093 = vshrl.u32 %v1092, 23
    %v1094 = vsub.s32 %v1093, 127
    %v1095 = vand.u32 2147483647, %v568
    %v1096 = vand.u32 %v1095, 8388607
    %v1097 = vor.u32 %v1096, 8388608
    %v1098 = vsub.s32 0, %v1097
    %v1099 = vadd.s32 %v1094, 1
    %vm1100 = vcmp.gt.s32.totalorder %v1099, 0
    %v1101 = vsel %vm1100, %v1099, 0
    %v1102 = vshrl.u32 %v1101, 5
    %v1103 = vand.u32 %v1101, 31
    %v1104 = vsub.s32 32, %v1103
    %v1105 = vshrl.u32 683565275, %v1104
    %v1106 = vshll.u32 683565275, %v1103
    %v1107 = vshrl.u32 2475754826, %v1104
    %v1108 = vor.u32 %v1106, %v1107
    %v1109 = vshll.u32 2475754826, %v1103
    %v1110 = vshrl.u32 2131351028, %v1104
    %v1111 = vor.u32 %v1109, %v1110
    %v1112 = vshll.u32 2131351028, %v1103
    %v1113 = vshrl.u32 2102212464, %v1104
    %v1114 = vor.u32 %v1112, %v1113
    %v1115 = vshll.u32 2102212464, %v1103
    %v1116 = vshrl.u32 920167782, %v1104
    %v1117 = vor.u32 %v1115, %v1116
    %v1118 = vshll.u32 920167782, %v1103
    %v1119 = vshrl.u32 1326507024, %v1104
    %v1120 = vor.u32 %v1118, %v1119
    %vm1121 = vcmp.lt.s32.totalorder %v1102, 1
    %vm1122 = vcmp.lt.s32.totalorder %v1102, 2
    %vm1123 = vcmp.lt.s32.totalorder %v1102, 3
    %vm1124 = vcmp.lt.s32.totalorder %v1102, 4
    %v1125 = vsel %vm1121, %v1105, %v1108
    %v1126 = vsel %vm1124, %v1114, 2102212464
    %v1127 = vsel %vm1123, %v1111, %v1126
    %v1128 = vsel %vm1122, %v1125, %v1127
    %v1129 = vsel %vm1121, %v1108, %v1111
    %v1130 = vsel %vm1124, %v1117, 920167782
    %v1131 = vsel %vm1123, %v1114, %v1130
    %v1132 = vsel %vm1122, %v1129, %v1131
    %v1133 = vsel %vm1121, %v1111, %v1114
    %v1134 = vsel %vm1124, %v1120, 1326507024
    %v1135 = vsel %vm1123, %v1117, %v1134
    %v1136 = vsel %vm1122, %v1133, %v1135
    %v1137 = vshll.u32 %v1097, 8
    %v1138 = vmul.u32.u64.compose %v1137, %v1136
    %v1139 = vextract.low.u32 %v1138
    %v1140 = vextract.high.u32 %v1138
    %v1141 = vmul.u32.u64.compose %v1137, %v1132
    %v1142 = vextract.low.u32 %v1141
    %v1143 = vextract.high.u32 %v1141
    %v1144 = vmul.u32 %v1137, %v1128
    %v1145 = vadd.s32 %v1140, %v1142
    %vm1146 = vc.u32 %v1140, %v1142
    %v1147 = vadd.s32 %v1143, 1
    %v1148 = vsel %vm1146, %v1147, %v1143
    %v1149 = vadd.s32 %v1144, %v1148
    %v1150 = vadd.s32 %v1149, 536870912
    %v1151 = vshrl.u32 %v1150, 30
    %v1152 = vshll.u32 %v1151, 30
    %v1153 = vsub.s32 %v1149, %v1152
    %vm1154 = vcmp.lt.s32.totalorder %v1153, 0
    %v1155 = vsub.s32 0, %v1153
    %v1156 = vsel %vm1154, %v1155, %v1153
    %v1157 = vclz %v1156
    %v1158 = vsub.s32 %v1157, 2
    %vm1159 = vcmp.gt.s32.totalorder 0, %v1158
    %v1160 = vsel %vm1159, 0, %v1158
    %v1161 = vsub.s32 32, %v1160
    %v1162 = vshll.u32 %v1153, %v1160
    %v1163 = vshrl.u32 %v1145, %v1161
    %v1164 = vor.u32 %v1162, %v1163
    %v1165 = vsub.s32 4294967266, %v1160
    %v1166 = vadd.s32 %v1165, 127
    %v1167 = vshll.u32 %v1166, 23
    %v1168 = vor.u32 4788187, %v1167
    %v1169 = vand.u32 2147483647, %v1168
    %v1171 = vcvt.s32.f32 %v1164
    %v1172 = vmul.f32 %v1171, %v1169
    %v1173 = vxor.u32 %v1172, 2147483648
    %v1174 = vsel %vm1091, %v1173, %v1172
    %v1175 = vsub.s32 4, %v1151
    %v1176 = vsel %vm1091, %v1175, %v1151
    %v1177 = vsel %vm1090, %v568, %v1174
    %v1178 = vsel %vm1090, 0, %v1176
    %v1179 = vcosq.f32.pop %v1177
    %v1180 = vsinq.f32.pop %v1177
    %vm1181 = vweird.f32 %v568
    %v1182 = vadd.s32 %v1178, 3
    %v1183 = vand.u32 %v1182, 3
    %vm1184 = vcmp.lt.s32.totalorder %v1183, 2
    %vm1185 = vcmp.eq.s32.totalorder %v1183, 0
    %v1186 = vxor.u32 %v1180, 2147483648
    %v1187 = vsel %vm1185, %v1179, %v1186
    %vm1188 = vcmp.eq.s32.totalorder %v1183, 2
    %v1189 = vxor.u32 %v1179, 2147483648
    %v1190 = vsel %vm1188, %v1189, %v1180
    %v1191 = vsel %vm1184, %v1187, %v1190
    %v1192 = vsel %vm1181, nan, %v1191
    %v1193 = vand.u32 2147483647, %v570
    %vm1194 = vcmp.le.f32.partialorder %v1193, 0.7853982
    %vm1195 = vcmp.lt.s32.totalorder %v570, 0
    %v1196 = vand.u32 %v570, 2139095040
    %v1197 = vshrl.u32 %v1196, 23
    %v1198 = vsub.s32 %v1197, 127
    %v1199 = vand.u32 2147483647, %v570
    %v1200 = vand.u32 %v1199, 8388607
    %v1201 = vor.u32 %v1200, 8388608
    %v1202 = vsub.s32 0, %v1201
    %v1203 = vadd.s32 %v1198, 1
    %vm1204 = vcmp.gt.s32.totalorder %v1203, 0
    %v1205 = vsel %vm1204, %v1203, 0
    %v1206 = vshrl.u32 %v1205, 5
    %v1207 = vand.u32 %v1205, 31
    %v1208 = vsub.s32 32, %v1207
    %v1209 = vshrl.u32 683565275, %v1208
    %v1210 = vshll.u32 683565275, %v1207
    %v1211 = vshrl.u32 2475754826, %v1208
    %v1212 = vor.u32 %v1210, %v1211
    %v1213 = vshll.u32 2475754826, %v1207
    %v1214 = vshrl.u32 2131351028, %v1208
    %v1215 = vor.u32 %v1213, %v1214
    %v1216 = vshll.u32 2131351028, %v1207
    %v1217 = vshrl.u32 2102212464, %v1208
    %v1218 = vor.u32 %v1216, %v1217
    %v1219 = vshll.u32 2102212464, %v1207
    %v1220 = vshrl.u32 920167782, %v1208
    %v1221 = vor.u32 %v1219, %v1220
    %v1222 = vshll.u32 920167782, %v1207
    %v1223 = vshrl.u32 1326507024, %v1208
    %v1224 = vor.u32 %v1222, %v1223
    %vm1225 = vcmp.lt.s32.totalorder %v1206, 1
    %vm1226 = vcmp.lt.s32.totalorder %v1206, 2
    %vm1227 = vcmp.lt.s32.totalorder %v1206, 3
    %vm1228 = vcmp.lt.s32.totalorder %v1206, 4
    %v1229 = vsel %vm1225, %v1209, %v1212
    %v1230 = vsel %vm1228, %v1218, 2102212464
    %v1231 = vsel %vm1227, %v1215, %v1230
    %v1232 = vsel %vm1226, %v1229, %v1231
    %v1233 = vsel %vm1225, %v1212, %v1215
    %v1234 = vsel %vm1228, %v1221, 920167782
    %v1235 = vsel %vm1227, %v1218, %v1234
    %v1236 = vsel %vm1226, %v1233, %v1235
    %v1237 = vsel %vm1225, %v1215, %v1218
    %v1238 = vsel %vm1228, %v1224, 1326507024
    %v1239 = vsel %vm1227, %v1221, %v1238
    %v1240 = vsel %vm1226, %v1237, %v1239
    %v1241 = vshll.u32 %v1201, 8
    %v1242 = vmul.u32.u64.compose %v1241, %v1240
    %v1243 = vextract.low.u32 %v1242
    %v1244 = vextract.high.u32 %v1242
    %v1245 = vmul.u32.u64.compose %v1241, %v1236
    %v1246 = vextract.low.u32 %v1245
    %v1247 = vextract.high.u32 %v1245
    %v1248 = vmul.u32 %v1241, %v1232
    %v1249 = vadd.s32 %v1244, %v1246
    %vm1250 = vc.u32 %v1244, %v1246
    %v1251 = vadd.s32 %v1247, 1
    %v1252 = vsel %vm1250, %v1251, %v1247
    %v1253 = vadd.s32 %v1248, %v1252
    %v1254 = vadd.s32 %v1253, 536870912
    %v1255 = vshrl.u32 %v1254, 30
    %v1256 = vshll.u32 %v1255, 30
    %v1257 = vsub.s32 %v1253, %v1256
    %vm1258 = vcmp.lt.s32.totalorder %v1257, 0
    %v1259 = vsub.s32 0, %v1257
    %v1260 = vsel %vm1258, %v1259, %v1257
    %v1261 = vclz %v1260
    %v1262 = vsub.s32 %v1261, 2
    %vm1263 = vcmp.gt.s32.totalorder 0, %v1262
    %v1264 = vsel %vm1263, 0, %v1262
    %v1265 = vsub.s32 32, %v1264
    %v1266 = vshll.u32 %v1257, %v1264
    %v1267 = vshrl.u32 %v1249, %v1265
    %v1268 = vor.u32 %v1266, %v1267
    %v1269 = vsub.s32 4294967266, %v1264
    %v1270 = vadd.s32 %v1269, 127
    %v1271 = vshll.u32 %v1270, 23
    %v1272 = vor.u32 4788187, %v1271
    %v1273 = vand.u32 2147483647, %v1272
    %v1275 = vcvt.s32.f32 %v1268
    %v1276 = vmul.f32 %v1275, %v1273
    %v1277 = vxor.u32 %v1276, 2147483648
    %v1278 = vsel %vm1195, %v1277, %v1276
    %v1279 = vsub.s32 4, %v1255
    %v1280 = vsel %vm1195, %v1279, %v1255
    %v1281 = vsel %vm1194, %v570, %v1278
    %v1282 = vsel %vm1194, 0, %v1280
    %v1283 = vcosq.f32.pop %v1281
    %v1284 = vsinq.f32.pop %v1281
    %vm1285 = vweird.f32 %v570
    %v1286 = vadd.s32 %v1282, 3
    %v1287 = vand.u32 %v1286, 3
    %vm1288 = vcmp.lt.s32.totalorder %v1287, 2
    %vm1289 = vcmp.eq.s32.totalorder %v1287, 0
    %v1290 = vxor.u32 %v1284, 2147483648
    %v1291 = vsel %vm1289, %v1283, %v1290
    %vm1292 = vcmp.eq.s32.totalorder %v1287, 2
    %v1293 = vxor.u32 %v1283, 2147483648
    %v1294 = vsel %vm1292, %v1293, %v1284
    %v1295 = vsel %vm1288, %v1291, %v1294
    %v1296 = vsel %vm1285, nan, %v1295
    %v1297 = vand.u32 2147483647, %v1085
    %vm1298 = vcmp.le.f32.partialorder %v1297, 0.7853982
    %vm1299 = vcmp.lt.s32.totalorder %v1085, 0
    %v1300 = vand.u32 %v1085, 2139095040
    %v1301 = vshrl.u32 %v1300, 23
    %v1302 = vsub.s32 %v1301, 127
    %v1303 = vand.u32 2147483647, %v1085
    %v1304 = vand.u32 %v1303, 8388607
    %v1305 = vor.u32 %v1304, 8388608
    %v1306 = vsub.s32 0, %v1305
    %v1307 = vadd.s32 %v1302, 1
    %vm1308 = vcmp.gt.s32.totalorder %v1307, 0
    %v1309 = vsel %vm1308, %v1307, 0
    %v1310 = vshrl.u32 %v1309, 5
    %v1311 = vand.u32 %v1309, 31
    %v1312 = vsub.s32 32, %v1311
    %v1313 = vshrl.u32 683565275, %v1312
    %v1314 = vshll.u32 683565275, %v1311
    %v1315 = vshrl.u32 2475754826, %v1312
    %v1316 = vor.u32 %v1314, %v1315
    %v1317 = vshll.u32 2475754826, %v1311
    %v1318 = vshrl.u32 2131351028, %v1312
    %v1319 = vor.u32 %v1317, %v1318
    %v1320 = vshll.u32 2131351028, %v1311
    %v1321 = vshrl.u32 2102212464, %v1312
    %v1322 = vor.u32 %v1320, %v1321
    %v1323 = vshll.u32 2102212464, %v1311
    %v1324 = vshrl.u32 920167782, %v1312
    %v1325 = vor.u32 %v1323, %v1324
    %v1326 = vshll.u32 920167782, %v1311
    %v1327 = vshrl.u32 1326507024, %v1312
    %v1328 = vor.u32 %v1326, %v1327
    %vm1329 = vcmp.lt.s32.totalorder %v1310, 1
    %vm1330 = vcmp.lt.s32.totalorder %v1310, 2
    %vm1331 = vcmp.lt.s32.totalorder %v1310, 3
    %vm1332 = vcmp.lt.s32.totalorder %v1310, 4
    %v1333 = vsel %vm1329, %v1313, %v1316
    %v1334 = vsel %vm1332, %v1322, 2102212464
    %v1335 = vsel %vm1331, %v1319, %v1334
    %v1336 = vsel %vm1330, %v1333, %v1335
    %v1337 = vsel %vm1329, %v1316, %v1319
    %v1338 = vsel %vm1332, %v1325, 920167782
    %v1339 = vsel %vm1331, %v1322, %v1338
    %v1340 = vsel %vm1330, %v1337, %v1339
    %v1341 = vsel %vm1329, %v1319, %v1322
    %v1342 = vsel %vm1332, %v1328, 1326507024
    %v1343 = vsel %vm1331, %v1325, %v1342
    %v1344 = vsel %vm1330, %v1341, %v1343
    %v1345 = vshll.u32 %v1305, 8
    %v1346 = vmul.u32.u64.compose %v1345, %v1344
    %v1347 = vextract.low.u32 %v1346
    %v1348 = vextract.high.u32 %v1346
    %v1349 = vmul.u32.u64.compose %v1345, %v1340
    %v1350 = vextract.low.u32 %v1349
    %v1351 = vextract.high.u32 %v1349
    %v1352 = vmul.u32 %v1345, %v1336
    %v1353 = vadd.s32 %v1348, %v1350
    %vm1354 = vc.u32 %v1348, %v1350
    %v1355 = vadd.s32 %v1351, 1
    %v1356 = vsel %vm1354, %v1355, %v1351
    %v1357 = vadd.s32 %v1352, %v1356
    %v1358 = vadd.s32 %v1357, 536870912
    %v1359 = vshrl.u32 %v1358, 30
    %v1360 = vshll.u32 %v1359, 30
    %v1361 = vsub.s32 %v1357, %v1360
    %vm1362 = vcmp.lt.s32.totalorder %v1361, 0
    %v1363 = vsub.s32 0, %v1361
    %v1364 = vsel %vm1362, %v1363, %v1361
    %v1365 = vclz %v1364
    %v1366 = vsub.s32 %v1365, 2
    %vm1367 = vcmp.gt.s32.totalorder 0, %v1366
    %v1368 = vsel %vm1367, 0, %v1366
    %v1369 = vsub.s32 32, %v1368
    %v1370 = vshll.u32 %v1361, %v1368
    %v1371 = vshrl.u32 %v1353, %v1369
    %v1372 = vor.u32 %v1370, %v1371
    %v1373 = vsub.s32 4294967266, %v1368
    %v1374 = vadd.s32 %v1373, 127
    %v1375 = vshll.u32 %v1374, 23
    %v1376 = vor.u32 4788187, %v1375
    %v1377 = vand.u32 2147483647, %v1376
    %v1379 = vcvt.s32.f32 %v1372
    %v1380 = vmul.f32 %v1379, %v1377
    %v1381 = vxor.u32 %v1380, 2147483648
    %v1382 = vsel %vm1299, %v1381, %v1380
    %v1383 = vsub.s32 4, %v1359
    %v1384 = vsel %vm1299, %v1383, %v1359
    %v1385 = vsel %vm1298, %v1085, %v1382
    %v1386 = vsel %vm1298, 0, %v1384
    %v1387 = vcosq.f32.pop %v1385
    %v1388 = vsinq.f32.pop %v1385
    %vm1389 = vweird.f32 %v1085
    %v1390 = vadd.s32 %v1386, 3
    %v1391 = vand.u32 %v1390, 3
    %vm1392 = vcmp.lt.s32.totalorder %v1391, 2
    %vm1393 = vcmp.eq.s32.totalorder %v1391, 0
    %v1394 = vxor.u32 %v1388, 2147483648
    %v1395 = vsel %vm1393, %v1387, %v1394
    %vm1396 = vcmp.eq.s32.totalorder %v1391, 2
    %v1397 = vxor.u32 %v1387, 2147483648
    %v1398 = vsel %vm1396, %v1397, %v1388
    %v1399 = vsel %vm1392, %v1395, %v1398
    %v1400 = vsel %vm1389, nan, %v1399
    %v1401 = vand.u32 2147483647, %v1087
    %vm1402 = vcmp.le.f32.partialorder %v1401, 0.7853982
    %vm1403 = vcmp.lt.s32.totalorder %v1087, 0
    %v1404 = vand.u32 %v1087, 2139095040
    %v1405 = vshrl.u32 %v1404, 23
    %v1406 = vsub.s32 %v1405, 127
    %v1407 = vand.u32 2147483647, %v1087
    %v1408 = vand.u32 %v1407, 8388607
    %v1409 = vor.u32 %v1408, 8388608
    %v1410 = vsub.s32 0, %v1409
    %v1411 = vadd.s32 %v1406, 1
    %vm1412 = vcmp.gt.s32.totalorder %v1411, 0
    %v1413 = vsel %vm1412, %v1411, 0
    %v1414 = vshrl.u32 %v1413, 5
    %v1415 = vand.u32 %v1413, 31
    %v1416 = vsub.s32 32, %v1415
    %v1417 = vshrl.u32 683565275, %v1416
    %v1418 = vshll.u32 683565275, %v1415
    %v1419 = vshrl.u32 2475754826, %v1416
    %v1420 = vor.u32 %v1418, %v1419
    %v1421 = vshll.u32 2475754826, %v1415
    %v1422 = vshrl.u32 2131351028, %v1416
    %v1423 = vor.u32 %v1421, %v1422
    %v1424 = vshll.u32 2131351028, %v1415
    %v1425 = vshrl.u32 2102212464, %v1416
    %v1426 = vor.u32 %v1424, %v1425
    %v1427 = vshll.u32 2102212464, %v1415
    %v1428 = vshrl.u32 920167782, %v1416
    %v1429 = vor.u32 %v1427, %v1428
    %v1430 = vshll.u32 920167782, %v1415
    %v1431 = vshrl.u32 1326507024, %v1416
    %v1432 = vor.u32 %v1430, %v1431
    %vm1433 = vcmp.lt.s32.totalorder %v1414, 1
    %vm1434 = vcmp.lt.s32.totalorder %v1414, 2
    %vm1435 = vcmp.lt.s32.totalorder %v1414, 3
    %vm1436 = vcmp.lt.s32.totalorder %v1414, 4
    %v1437 = vsel %vm1433, %v1417, %v1420
    %v1438 = vsel %vm1436, %v1426, 2102212464
    %v1439 = vsel %vm1435, %v1423, %v1438
    %v1440 = vsel %vm1434, %v1437, %v1439
    %v1441 = vsel %vm1433, %v1420, %v1423
    %v1442 = vsel %vm1436, %v1429, 920167782
    %v1443 = vsel %vm1435, %v1426, %v1442
    %v1444 = vsel %vm1434, %v1441, %v1443
    %v1445 = vsel %vm1433, %v1423, %v1426
    %v1446 = vsel %vm1436, %v1432, 1326507024
    %v1447 = vsel %vm1435, %v1429, %v1446
    %v1448 = vsel %vm1434, %v1445, %v1447
    %v1449 = vshll.u32 %v1409, 8
    %v1450 = vmul.u32.u64.compose %v1449, %v1448
    %v1451 = vextract.low.u32 %v1450
    %v1452 = vextract.high.u32 %v1450
    %v1453 = vmul.u32.u64.compose %v1449, %v1444
    %v1454 = vextract.low.u32 %v1453
    %v1455 = vextract.high.u32 %v1453
    %v1456 = vmul.u32 %v1449, %v1440
    %v1457 = vadd.s32 %v1452, %v1454
    %vm1458 = vc.u32 %v1452, %v1454
    %v1459 = vadd.s32 %v1455, 1
    %v1460 = vsel %vm1458, %v1459, %v1455
    %v1461 = vadd.s32 %v1456, %v1460
    %v1462 = vadd.s32 %v1461, 536870912
    %v1463 = vshrl.u32 %v1462, 30
    %v1464 = vshll.u32 %v1463, 30
    %v1465 = vsub.s32 %v1461, %v1464
    %vm1466 = vcmp.lt.s32.totalorder %v1465, 0
    %v1467 = vsub.s32 0, %v1465
    %v1468 = vsel %vm1466, %v1467, %v1465
    %v1469 = vclz %v1468
    %v1470 = vsub.s32 %v1469, 2
    %vm1471 = vcmp.gt.s32.totalorder 0, %v1470
    %v1472 = vsel %vm1471, 0, %v1470
    %v1473 = vsub.s32 32, %v1472
    %v1474 = vshll.u32 %v1465, %v1472
    %v1475 = vshrl.u32 %v1457, %v1473
    %v1476 = vor.u32 %v1474, %v1475
    %v1477 = vsub.s32 4294967266, %v1472
    %v1478 = vadd.s32 %v1477, 127
    %v1479 = vshll.u32 %v1478, 23
    %v1480 = vor.u32 4788187, %v1479
    %v1481 = vand.u32 2147483647, %v1480
    %v1483 = vcvt.s32.f32 %v1476
    %v1484 = vmul.f32 %v1483, %v1481
    %v1485 = vxor.u32 %v1484, 2147483648
    %v1486 = vsel %vm1403, %v1485, %v1484
    %v1487 = vsub.s32 4, %v1463
    %v1488 = vsel %vm1403, %v1487, %v1463
    %v1489 = vsel %vm1402, %v1087, %v1486
    %v1490 = vsel %vm1402, 0, %v1488
    %v1491 = vcosq.f32.pop %v1489
    %v1492 = vsinq.f32.pop %v1489
    %vm1493 = vweird.f32 %v1087
    %v1494 = vadd.s32 %v1490, 3
    %v1495 = vand.u32 %v1494, 3
    %vm1496 = vcmp.lt.s32.totalorder %v1495, 2
    %vm1497 = vcmp.eq.s32.totalorder %v1495, 0
    %v1498 = vxor.u32 %v1492, 2147483648
    %v1499 = vsel %vm1497, %v1491, %v1498
    %vm1500 = vcmp.eq.s32.totalorder %v1495, 2
    %v1501 = vxor.u32 %v1491, 2147483648
    %v1502 = vsel %vm1500, %v1501, %v1492
    %v1503 = vsel %vm1496, %v1499, %v1502
    %v1504 = vsel %vm1493, nan, %v1503
    %1505 = vst [vmem:[%s2] sm:$0xff] %v1192
    %1506 = vst [vmem:[%s2 + $0x8] sm:$0xff] %v1296
    %1507 = vst [vmem:[%s2 + $0x10] sm:$0xff] %v1400
    %1508 = vst [vmem:[%s2 + $0x18] sm:$0xff] %v1504
    // Predicated region
    $region14: #{_pe_encode.1} parent=1 // pred_check
      _
    $region15: #{_pe_encode.1} parent=1 // pred_check_branch
      %1510 = sbr.rel (0) target = $region17
    $region16: #{_pe_encode.1} parent=1 // pred_region
      _
    $region17: #{_pe_encode.1} parent=1 // pred_fallthru
      _
    // Predicated region
    $region18: #{_pe_encode.1} parent=1 // pred_check
      _
    $region19: #{_pe_encode.1} parent=1 // pred_check_branch
      %1512 = sbr.rel (0) target = $region21
    $region20: #{_pe_encode.1} parent=1 // pred_region
      _
    $region21: #{_pe_encode.1} parent=1 // pred_fallthru
      _
    %1513 = vsyncpa [#allocation3], 1

</llo_original>
